<compile_context>
chip_gen: v6e
topology: v6e:2x2x1
jax: 0.10.0
libtpu: 0.0.40
codegen_flags: <defaults>
</compile_context>

<pallas_src>
import functools

import jax
import jax.numpy as jnp
from jax.experimental import pallas as pl
from jax.experimental.pallas import tpu as pltpu


def _round_up(v, m):
    return (v + m - 1) // m * m


def _dpp_kernel(x_ref, wab_ref, bab_ref, wg_ref, bg_ref, wgu_ref, bgu_ref,
                out_ref, *, out_p, out_f):
    """One batch tile: gate branch first, then wide A|B matmul, then blend."""
    cdt = wab_ref.dtype
    # In-kernel dtype cast (VPU, hidden under MXU/DMA); x stays f32 in HBM.
    x = x_ref[...].astype(cdt)                                        # [TB, In]

    # --- Gate branch first so the EUP sigmoid / VPU blend can hide under the
    # --- wide MXU push instead of forming an exposed epilogue.
    x_g = jnp.dot(x, wg_ref[...],
                  preferred_element_type=jnp.float32) + bg_ref[...]   # [TB, G_p]
    g_logits = jnp.dot(x_g.astype(cdt), wgu_ref[...],
                       preferred_element_type=jnp.float32) + bgu_ref[...]  # [TB, Out_p]
    alpha = jax.nn.sigmoid(g_logits)

    # --- Wide fused A|B matmul; slices are lane-aligned (out_p multiple of 128).
    zab = jnp.dot(x, wab_ref[...],
                  preferred_element_type=jnp.float32) + bab_ref[...]  # [TB, 2*Out_p]
    z_a = zab[:, :out_p]
    z_b = zab[:, out_p:]

    # z_b + alpha*(z_a - z_b)  ==  alpha*z_a + (1-alpha)*z_b  (one fewer VPU mul)
    res = z_b + alpha * (z_a - z_b)
    out_ref[...] = res[:, :out_f].astype(out_ref.dtype)


def prepare_params(w_a, b_a, w_b, b_b, w_g_shared, b_g_shared,
                   w_g_unit, b_g_unit, *, compute_dtype=jnp.bfloat16):
    """One-time prep: transpose (PyTorch [out,in] -> [in,out]), fuse A|B,
    lane-pad to 128 for in-kernel alignment, cast to the MXU compute dtype."""
    out_f, in_f = w_a.shape
    g_dim = w_g_shared.shape[0]
    out_p = _round_up(out_f, 128)
    g_p = _round_up(g_dim, 128)

    w_ab = jnp.zeros((in_f, 2 * out_p), compute_dtype)
    w_ab = w_ab.at[:, :out_f].set(w_a.T.astype(compute_dtype))
    w_ab = w_ab.at[:, out_p:out_p + out_f].set(w_b.T.astype(compute_dtype))

    b_ab = jnp.zeros((1, 2 * out_p), jnp.float32)
    b_ab = b_ab.at[0, :out_f].set(b_a.astype(jnp.float32))
    b_ab = b_ab.at[0, out_p:out_p + out_f].set(b_b.astype(jnp.float32))

    w_g = jnp.zeros((in_f, g_p), compute_dtype)
    w_g = w_g.at[:, :g_dim].set(w_g_shared.T.astype(compute_dtype))
    b_g = jnp.zeros((1, g_p), jnp.float32)
    b_g = b_g.at[0, :g_dim].set(b_g_shared.astype(jnp.float32))

    w_gu = jnp.zeros((g_p, out_p), compute_dtype)
    w_gu = w_gu.at[:g_dim, :out_f].set(w_g_unit.T.astype(compute_dtype))
    b_gu = jnp.zeros((1, out_p), jnp.float32)
    b_gu = b_gu.at[0, :out_f].set(b_g_unit.astype(jnp.float32))

    return dict(w_ab=w_ab, b_ab=b_ab, w_g=w_g, b_g=b_g, w_gu=w_gu, b_gu=b_gu,
                in_f=in_f, out_f=out_f, out_p=out_p, g_p=g_p)


def dpp_layer_shared_g(x, params, *, block_b=512,
                       vmem_budget_bytes=48 * 1024 * 1024):
    """x: [B, In] (f32); params from prepare_params(); returns [B, Out]."""
    b, in_f = x.shape
    assert in_f == params["in_f"]
    out_f, out_p, g_p = params["out_f"], params["out_p"], params["g_p"]
    w_itemsize = jnp.dtype(params["w_ab"].dtype).itemsize
    x_itemsize = jnp.dtype(x.dtype).itemsize

    # ---- explicit per-TensorCore VMEM budget (v7x 64 MiB safe by default) ----
    weight_bytes = ((in_f * 2 * out_p + in_f * g_p + g_p * out_p) * w_itemsize
                    + (3 * out_p + g_p) * 4)                 # single-buffered
    per_row_bytes = (2 * in_f * x_itemsize                   # x double buffer
                     + 2 * out_f * x_itemsize                # out double buffer
                     + (4 * out_p + g_p) * 4)                # f32 intermediates
    tb = max(8, min(_round_up(block_b, 8), _round_up(b, 8)))  # multiple of 8
    if weight_bytes + tb * per_row_bytes > vmem_budget_bytes:
        tb_fit = (vmem_budget_bytes - weight_bytes) // per_row_bytes
        tb = max(8, min(tb, (max(tb_fit, 8) // 8) * 8))
    # TODO(synk): if weight_bytes alone ever exceeds the per-core budget (very
    # large In on v7x), add a K (in_f) reduction grid axis with an f32 VMEM
    # accumulator + pl.when init/finalize instead of shrinking tb further.

    grid = (pl.cdiv(b, tb),)  # partial last block: OOB rows unused, writes dropped
    kernel = functools.partial(_dpp_kernel, out_p=out_p, out_f=out_f)

    flops = (2 * b * in_f * (2 * out_p + g_p)
             + 2 * b * g_p * out_p + 6 * b * out_p)
    bytes_accessed = (b * in_f * x_itemsize + weight_bytes + b * out_f * x_itemsize)
    cost = pl.CostEstimate(flops=int(flops), transcendentals=int(b * out_p),
                           bytes_accessed=int(bytes_accessed))

    vmem_limit = int(min(max(weight_bytes + tb * per_row_bytes + (8 << 20),
                             32 << 20), 112 << 20))
    resident = dict(pipeline_mode=pl.Buffered(1))  # invariant operands: 1 buffer

    out = pl.pallas_call(
        kernel,
        out_shape=jax.ShapeDtypeStruct((b, out_f), x.dtype),
        grid=grid,
        in_specs=[
            pl.BlockSpec((tb, in_f), lambda i: (i, 0)),                     # x tile (pipelined)
            pl.BlockSpec((in_f, 2 * out_p), lambda i: (0, 0), **resident),  # [Wa|Wb]
            pl.BlockSpec((1, 2 * out_p), lambda i: (0, 0), **resident),     # [ba|bb]
            pl.BlockSpec((in_f, g_p), lambda i: (0, 0), **resident),        # Wg_shared
            pl.BlockSpec((1, g_p), lambda i: (0, 0), **resident),           # bg_shared
            pl.BlockSpec((g_p, out_p), lambda i: (0, 0), **resident),       # Wg_unit
            pl.BlockSpec((1, out_p), lambda i: (0, 0), **resident),         # bg_unit
        ],
        out_specs=pl.BlockSpec((tb, out_f), lambda i: (i, 0)),
        compiler_params=pltpu.CompilerParams(
            dimension_semantics=("parallel",),
            vmem_limit_bytes=vmem_limit,
        ),
        cost_estimate=cost,
    )(x, params["w_ab"], params["b_ab"], params["w_g"], params["b_g"],
      params["w_gu"], params["b_gu"])
    return out


# ----------------------------------------------------------------------------
# Reference + init helpers for the self-test
# ----------------------------------------------------------------------------
def _reference(x, w_a, b_a, w_b, b_b, w_g_shared, b_g_shared, w_g_unit, b_g_unit):
    z_a = x @ w_a.T + b_a
    z_b = x @ w_b.T + b_b
    x_g = x @ w_g_shared.T + b_g_shared
    alpha = jax.nn.sigmoid(x_g @ w_g_unit.T + b_g_unit)
    return alpha * z_a + (1.0 - alpha) * z_b


def _kaiming_uniform_like(key, shape):
    # nn.init.kaiming_uniform_(w, a=sqrt(5)) on a [out, in] weight.
    fan_in = shape[1]
    bound = (1.0 / 3.0) ** 0.5 * (3.0 / fan_in) ** 0.5
    return jax.random.uniform(key, shape, jnp.float32, -bound, bound)


def _bias_uniform_like(key, fan_in, n):
    bound = 1.0 / fan_in ** 0.5 if fan_in > 0 else 0.0
    return jax.random.uniform(key, (n,), jnp.float32, -bound, bound)


if __name__ == "__main__":
    B, In, Out, G = 8, 32, 16, 8

    key = jax.random.PRNGKey(0)
    ks = jax.random.split(key, 10)

    x = jax.random.normal(ks[0], (B, In), jnp.float32)
    w_a = _kaiming_uniform_like(ks[1], (Out, In))
    b_a = _bias_uniform_like(ks[2], In, Out)
    w_b = _kaiming_uniform_like(ks[3], (Out, In))
    b_b = _bias_uniform_like(ks[4], In, Out)
    w_g_shared = _kaiming_uniform_like(ks[5], (G, In))
    b_g_shared = _bias_uniform_like(ks[6], In, G)
    w_g_unit = _kaiming_uniform_like(ks[7], (Out, G))
    b_g_unit = _bias_uniform_like(ks[8], G, Out)

    ref = _reference(x, w_a, b_a, w_b, b_b,
                     w_g_shared, b_g_shared, w_g_unit, b_g_unit)

    # 1) f32 verification path: near bit-accurate vs reference.
    params_f32 = prepare_params(w_a, b_a, w_b, b_b, w_g_shared, b_g_shared,
                                w_g_unit, b_g_unit, compute_dtype=jnp.float32)
    out_f32 = dpp_layer_shared_g(x, params_f32)
    jax.block_until_ready(out_f32)
    assert out_f32.shape == (B, Out)
    assert jnp.allclose(out_f32, ref, atol=1e-5, rtol=1e-5)

    # 2) Multi-step grid with a partial last block (B not multiple of tile,
    #    no wrapper-side padding/copy of x).
    B2 = 200
    x2 = jax.random.normal(ks[9], (B2, In), jnp.float32)
    ref2 = _reference(x2, w_a, b_a, w_b, b_b,
                      w_g_shared, b_g_shared, w_g_unit, b_g_unit)
    out2 = dpp_layer_shared_g(x2, params_f32, block_b=64)   # grid=(4,), last block partial
    jax.block_until_ready(out2)
    assert out2.shape == (B2, Out)
    assert jnp.allclose(out2, ref2, atol=1e-5, rtol=1e-5)

    # 3) Default bf16 MXU fast path (f32 accumulation), loose tolerance.
    params_bf16 = prepare_params(w_a, b_a, w_b, b_b, w_g_shared, b_g_shared,
                                 w_g_unit, b_g_unit)        # compute_dtype=bf16
    out_bf16 = dpp_layer_shared_g(x, params_bf16)
    jax.block_until_ready(out_bf16)
    assert out_bf16.shape == (B, Out)
    assert jnp.allclose(out_bf16, ref, atol=3e-2, rtol=3e-2)

    print("KERNEL_OK")
</pallas_src>

<mosaic_0001>
module attributes {stable_mosaic.version = 11 : i64} {
  func.func @_dpp_kernel(%arg0: i32, %arg1: memref<8x32xf32, #tpu.memory_space<vmem>>, %arg2: memref<32x256xf32, #tpu.memory_space<vmem>>, %arg3: memref<1x256xf32, #tpu.memory_space<vmem>>, %arg4: memref<32x128xf32, #tpu.memory_space<vmem>>, %arg5: memref<1x128xf32, #tpu.memory_space<vmem>>, %arg6: memref<128x128xf32, #tpu.memory_space<vmem>>, %arg7: memref<1x128xf32, #tpu.memory_space<vmem>>, %arg8: memref<8x16xf32, #tpu.memory_space<vmem>>) attributes {dimension_semantics = [#tpu.dimension_semantics<parallel>], iteration_bounds = array<i64: 1>, scalar_prefetch = 0 : i64, scratch_operands = 0 : i64, tpu.core_type = #tpu.core_type<tc>, window_params = [{transform_indices = @transform_0, window_bounds = array<i64: 8, 32>}, {pipeline_mode = #tpu.pipeline_mode<synchronous>, transform_indices = @transform_1, window_bounds = array<i64: 32, 256>}, {pipeline_mode = #tpu.pipeline_mode<synchronous>, transform_indices = @transform_2, window_bounds = array<i64: 1, 256>}, {pipeline_mode = #tpu.pipeline_mode<synchronous>, transform_indices = @transform_3, window_bounds = array<i64: 32, 128>}, {pipeline_mode = #tpu.pipeline_mode<synchronous>, transform_indices = @transform_4, window_bounds = array<i64: 1, 128>}, {pipeline_mode = #tpu.pipeline_mode<synchronous>, transform_indices = @transform_5, window_bounds = array<i64: 128, 128>}, {pipeline_mode = #tpu.pipeline_mode<synchronous>, transform_indices = @transform_6, window_bounds = array<i64: 1, 128>}, {transform_indices = @transform_7, window_bounds = array<i64: 8, 16>}]} {
    %c0 = arith.constant 0 : index
    %c0_0 = arith.constant 0 : index
    %0 = vector.load %arg1[%c0, %c0_0] : memref<8x32xf32, #tpu.memory_space<vmem>>, vector<8x32xf32>
    %c0_1 = arith.constant 0 : index
    %c0_2 = arith.constant 0 : index
    %1 = vector.load %arg4[%c0_1, %c0_2] : memref<32x128xf32, #tpu.memory_space<vmem>>, vector<32x128xf32>
    %cst = arith.constant dense<0.000000e+00> : vector<8x128xf32>
    %2 = tpu.matmul %0, %1, %cst {dimension_numbers = #tpu.dot_dimension_numbers<[1], [0], [0], [1], [0, 0, 1, 1], [], []>} : vector<8x32xf32>, vector<32x128xf32>, vector<8x128xf32> -> vector<8x128xf32>
    %c0_3 = arith.constant 0 : index
    %c0_4 = arith.constant 0 : index
    %3 = vector.load %arg5[%c0_3, %c0_4] : memref<1x128xf32, #tpu.memory_space<vmem>>, vector<1x128xf32>
    %4 = vector.broadcast %3 : vector<1x128xf32> to vector<8x128xf32>
    %5 = arith.addf %2, %4 : vector<8x128xf32>
    %c0_5 = arith.constant 0 : index
    %c0_6 = arith.constant 0 : index
    %6 = vector.load %arg6[%c0_5, %c0_6] : memref<128x128xf32, #tpu.memory_space<vmem>>, vector<128x128xf32>
    %cst_7 = arith.constant dense<0.000000e+00> : vector<8x128xf32>
    %7 = tpu.matmul %5, %6, %cst_7 {dimension_numbers = #tpu.dot_dimension_numbers<[1], [0], [0], [1], [0, 0, 1, 1], [], []>} : vector<8x128xf32>, vector<128x128xf32>, vector<8x128xf32> -> vector<8x128xf32>
    %c0_8 = arith.constant 0 : index
    %c0_9 = arith.constant 0 : index
    %8 = vector.load %arg7[%c0_8, %c0_9] : memref<1x128xf32, #tpu.memory_space<vmem>>, vector<1x128xf32>
    %9 = vector.broadcast %8 : vector<1x128xf32> to vector<8x128xf32>
    %10 = arith.addf %7, %9 : vector<8x128xf32>
    %11 = arith.negf %10 : vector<8x128xf32>
    %12 = math.exp %11 : vector<8x128xf32>
    %cst_10 = arith.constant 1.000000e+00 : f32
    %13 = vector.broadcast %cst_10 : f32 to vector<8x128xf32>
    %14 = arith.addf %13, %12 : vector<8x128xf32>
    %15 = arith.divf %13, %14 : vector<8x128xf32>
    %c0_11 = arith.constant 0 : index
    %c0_12 = arith.constant 0 : index
    %16 = vector.load %arg2[%c0_11, %c0_12] : memref<32x256xf32, #tpu.memory_space<vmem>>, vector<32x256xf32>
    %cst_13 = arith.constant dense<0.000000e+00> : vector<8x256xf32>
    %17 = tpu.matmul %0, %16, %cst_13 {dimension_numbers = #tpu.dot_dimension_numbers<[1], [0], [0], [1], [0, 0, 1, 1], [], []>} : vector<8x32xf32>, vector<32x256xf32>, vector<8x256xf32> -> vector<8x256xf32>
    %c0_14 = arith.constant 0 : index
    %c0_15 = arith.constant 0 : index
    %18 = vector.load %arg3[%c0_14, %c0_15] : memref<1x256xf32, #tpu.memory_space<vmem>>, vector<1x256xf32>
    %19 = vector.broadcast %18 : vector<1x256xf32> to vector<8x256xf32>
    %20 = arith.addf %17, %19 : vector<8x256xf32>
    %21 = vector.extract_strided_slice %20 {offsets = [0, 0], sizes = [8, 128], strides = [1, 1]} : vector<8x256xf32> to vector<8x128xf32>
    %22 = vector.extract_strided_slice %20 {offsets = [0, 128], sizes = [8, 128], strides = [1, 1]} : vector<8x256xf32> to vector<8x128xf32>
    %23 = arith.subf %21, %22 : vector<8x128xf32>
    %24 = arith.mulf %15, %23 : vector<8x128xf32>
    %25 = arith.addf %22, %24 : vector<8x128xf32>
    %26 = vector.extract_strided_slice %25 {offsets = [0, 0], sizes = [8, 16], strides = [1, 1]} : vector<8x128xf32> to vector<8x16xf32>
    %c0_16 = arith.constant 0 : index
    %c0_17 = arith.constant 0 : index
    %27 = vector.load %arg8[%c0_16, %c0_17] : memref<8x16xf32, #tpu.memory_space<vmem>>, vector<8x16xf32>
    tpu.vector_store %arg8[%c0_16, %c0_17], %26 {strides = array<i32>} : memref<8x16xf32, #tpu.memory_space<vmem>>, vector<8x16xf32>,
    return
  }
  func.func @transform_0(%arg0: i32) -> (i32, i32) {
    %c0_i32 = arith.constant 0 : i32
    %c0_i32_0 = arith.constant 0 : i32
    return %arg0, %c0_i32 : i32, i32
  }
  func.func @transform_1(%arg0: i32) -> (i32, i32) {
    %c0_i32 = arith.constant 0 : i32
    %c0_i32_0 = arith.constant 0 : i32
    %c0_i32_1 = arith.constant 0 : i32
    return %c0_i32, %c0_i32_0 : i32, i32
  }
  func.func @transform_2(%arg0: i32) -> (i32, i32) {
    %c0_i32 = arith.constant 0 : i32
    %c0_i32_0 = arith.constant 0 : i32
    %c0_i32_1 = arith.constant 0 : i32
    return %c0_i32, %c0_i32_0 : i32, i32
  }
  func.func @transform_3(%arg0: i32) -> (i32, i32) {
    %c0_i32 = arith.constant 0 : i32
    %c0_i32_0 = arith.constant 0 : i32
    %c0_i32_1 = arith.constant 0 : i32
    return %c0_i32, %c0_i32_0 : i32, i32
  }
  func.func @transform_4(%arg0: i32) -> (i32, i32) {
    %c0_i32 = arith.constant 0 : i32
    %c0_i32_0 = arith.constant 0 : i32
    %c0_i32_1 = arith.constant 0 : i32
    return %c0_i32, %c0_i32_0 : i32, i32
  }
  func.func @transform_5(%arg0: i32) -> (i32, i32) {
    %c0_i32 = arith.constant 0 : i32
    %c0_i32_0 = arith.constant 0 : i32
    %c0_i32_1 = arith.constant 0 : i32
    return %c0_i32, %c0_i32_0 : i32, i32
  }
  func.func @transform_6(%arg0: i32) -> (i32, i32) {
    %c0_i32 = arith.constant 0 : i32
    %c0_i32_0 = arith.constant 0 : i32
    %c0_i32_1 = arith.constant 0 : i32
    return %c0_i32, %c0_i32_0 : i32, i32
  }
  func.func @transform_7(%arg0: i32) -> (i32, i32) {
    %c0_i32 = arith.constant 0 : i32
    %c0_i32_0 = arith.constant 0 : i32
    return %arg0, %c0_i32 : i32, i32
  }
}

</mosaic_0001>

<llo_original>
// kernel: tpu_custom_call.1
$region0: #{tpu_custom_call.1}
  #allocation0 [shape = 'u32[]', space=smem, size = 0x4, offset = 0x4, fixed_abs, tag = 'smem constant byte address 0x4 - core index']
  #allocation1 [shape = 'u32[144,128]{1,0:T(1,128)}', space=vmem, size = 0x12000, scoped, tag = 'internal scratch']
  %s0 = inlined_call_operand.hbm [shape: f32[8,32], index: 0, kind: input, shape index: {}]
  %s1 = inlined_call_operand.hbm [shape: f32[32,256], index: 1, kind: input, shape index: {}]
  %s2 = inlined_call_operand.vmem [shape: f32[1,256], index: 2, kind: input, shape index: {}]
  %s3 = inlined_call_operand.hbm [shape: f32[32,128], index: 3, kind: input, shape index: {}]
  %s4 = inlined_call_operand.vmem [shape: f32[1,128], index: 4, kind: input, shape index: {}]
  %s5 = inlined_call_operand.hbm [shape: f32[128,128], index: 5, kind: input, shape index: {}]
  %s6 = inlined_call_operand.vmem [shape: f32[1,128], index: 6, kind: input, shape index: {}]
  %s7 = inlined_call_operand.hbm [shape: f32[8,16], index: 7, kind: output, shape index: {}]
  %s8 = sld [smem:[#allocation0]]
  $region54: #{tpu_custom_call.1} parent=0
    _
  %s10 = ssub.s32 1, %s8
  %s11 = scalar_select 0, %s10, %s8
  $region1: #{tpu_custom_call.1} parent=0
    #allocation2 [shape = 'u8[4096]{0}', space=vmem, size = 0x1000, scoped, tag = 'input window, operand 0, single buffered']
    #allocation3 [shape = 's32[1]{0}', space=sflag, size = 0x4, scoped, tag = 'scoped memory for tpu_custom_call.1']
    #allocation4 [shape = 's32[1]{0}', space=sflag, size = 0x4, scoped, tag = 'scoped memory for tpu_custom_call.1']
    #allocation5 [shape = 'u8[32768]{0}', space=vmem, size = 0x8000, scoped, tag = 'input window, operand 1, single buffered']
    #allocation6 [shape = 's32[1]{0}', space=sflag, size = 0x4, scoped, tag = 'scoped memory for tpu_custom_call.1']
    #allocation7 [shape = 'u8[16384]{0}', space=vmem, size = 0x4000, scoped, tag = 'input window, operand 3, single buffered']
    #allocation8 [shape = 'u8[65536]{0}', space=vmem, size = 0x10000, scoped, tag = 'input window, operand 5, single buffered']
    #allocation9 [shape = 's32[1]{0}', space=sflag, size = 0x4, scoped, tag = 'scoped memory for tpu_custom_call.1']
    #allocation10 [shape = 'u8[4096]{0}', space=vmem, size = 0x1000, scoped, tag = 'output window, operand 0, single buffered']
    %12 = vsyncpa [#allocation3], 0
    %13 = vsyncpa [#allocation6], 0
    %14 = vsyncpa [#allocation9], 0
    %15 = vsyncpa [#allocation4], 0
    // Predicated region
    $region2: #{tpu_custom_call.1} parent=1 // pred_check
      _
    $region3: #{tpu_custom_call.1} parent=1 // pred_check_branch
      %17 = sbr.rel (0) target = $region5
    $region4: #{tpu_custom_call.1} parent=1 // pred_region
      %s19 = ssub.s32 128, 128
      %20 = vsyncadd [#allocation3], %s19
      %s22 = sshll.u32 [#allocation2], 4
      %s23 = int_to_ptr.vmem [resolvable:$true] %s22
      %25 = dma.hbm_to_vmem [thread:$0]  %s0, 128, %s23, [#allocation3]
    $region5: #{tpu_custom_call.1} parent=1 // pred_fallthru
      _
    // Predicated region
    $region6: #{tpu_custom_call.1} parent=1 // pred_check
      _
    $region7: #{tpu_custom_call.1} parent=1 // pred_check_branch
      %27 = sbr.rel (0) target = $region9
    $region8: #{tpu_custom_call.1} parent=1 // pred_region
      %s29 = ssub.s32 1024, 1024
      %30 = vsyncadd [#allocation6], %s29
      %s31 = sshll.u32 [#allocation5], 4
      %s32 = int_to_ptr.vmem [resolvable:$true] %s31
      %37 = dma.hbm_to_vmem [thread:$0]  %s1, 1024, %s32, [#allocation6], 256, 256, 16
    $region9: #{tpu_custom_call.1} parent=1 // pred_fallthru
      _
    // Predicated region
    $region10: #{tpu_custom_call.1} parent=1 // pred_check
      _
    $region11: #{tpu_custom_call.1} parent=1 // pred_check_branch
      %39 = sbr.rel (0) target = $region13
    $region12: #{tpu_custom_call.1} parent=1 // pred_region
      _
    $region13: #{tpu_custom_call.1} parent=1 // pred_fallthru
      _
    // Predicated region
    $region14: #{tpu_custom_call.1} parent=1 // pred_check
      _
    $region15: #{tpu_custom_call.1} parent=1 // pred_check_branch
      %41 = sbr.rel (0) target = $region17
    $region16: #{tpu_custom_call.1} parent=1 // pred_region
      %s43 = ssub.s32 512, 512
      %44 = vsyncadd [#allocation6], %s43
      %s45 = sshll.u32 [#allocation7], 4
      %s46 = int_to_ptr.vmem [resolvable:$true] %s45
      %51 = dma.hbm_to_vmem [thread:$0]  %s3, 512, %s46, [#allocation6], 128, 128, 8
    $region17: #{tpu_custom_call.1} parent=1 // pred_fallthru
      _
    // Predicated region
    $region18: #{tpu_custom_call.1} parent=1 // pred_check
      _
    $region19: #{tpu_custom_call.1} parent=1 // pred_check_branch
      %53 = sbr.rel (0) target = $region21
    $region20: #{tpu_custom_call.1} parent=1 // pred_region
      _
    $region21: #{tpu_custom_call.1} parent=1 // pred_fallthru
      _
    // Predicated region
    $region22: #{tpu_custom_call.1} parent=1 // pred_check
      _
    $region23: #{tpu_custom_call.1} parent=1 // pred_check_branch
      %55 = sbr.rel (0) target = $region25
    $region24: #{tpu_custom_call.1} parent=1 // pred_region
      %s57 = ssub.s32 2048, 2048
      %58 = vsyncadd [#allocation9], %s57
      %s59 = sshll.u32 [#allocation8], 4
      %s60 = int_to_ptr.vmem [resolvable:$true] %s59
      %65 = dma.hbm_to_vmem [thread:$0]  %s5, 2048, %s60, [#allocation9], 128, 128, 8
    $region25: #{tpu_custom_call.1} parent=1 // pred_fallthru
      _
    // Predicated region
    $region26: #{tpu_custom_call.1} parent=1 // pred_check
      _
    $region27: #{tpu_custom_call.1} parent=1 // pred_check_branch
      %67 = sbr.rel (0) target = $region29
    $region28: #{tpu_custom_call.1} parent=1 // pred_region
      _
    $region29: #{tpu_custom_call.1} parent=1 // pred_fallthru
      _
    // Predicated region
    $region30: #{tpu_custom_call.1} parent=1 // pred_check
      _
    $region31: #{tpu_custom_call.1} parent=1 // pred_check_branch
      %69 = sbr.rel (0) target = $region33
    $region32: #{tpu_custom_call.1} parent=1 // pred_region
      %70 = dma.done [#allocation3], 128
    $region33: #{tpu_custom_call.1} parent=1 // pred_fallthru
      _
    // Predicated region
    $region34: #{tpu_custom_call.1} parent=1 // pred_check
      _
    $region35: #{tpu_custom_call.1} parent=1 // pred_check_branch
      %72 = sbr.rel (0) target = $region37
    $region36: #{tpu_custom_call.1} parent=1 // pred_region
      %73 = dma.done [#allocation6], 1024
    $region37: #{tpu_custom_call.1} parent=1 // pred_fallthru
      _
    // Predicated region
    $region38: #{tpu_custom_call.1} parent=1 // pred_check
      _
    $region39: #{tpu_custom_call.1} parent=1 // pred_check_branch
      %75 = sbr.rel (0) target = $region41
    $region40: #{tpu_custom_call.1} parent=1 // pred_region
      %76 = dma.done [#allocation6], 512
    $region41: #{tpu_custom_call.1} parent=1 // pred_fallthru
      _
    // Predicated region
    $region42: #{tpu_custom_call.1} parent=1 // pred_check
      _
    $region43: #{tpu_custom_call.1} parent=1 // pred_check_branch
      %78 = sbr.rel (0) target = $region45
    $region44: #{tpu_custom_call.1} parent=1 // pred_region
      %79 = dma.done [#allocation9], 2048
    $region45: #{tpu_custom_call.1} parent=1 // pred_fallthru
      _
    %v80 = vld [vmem:[#allocation2] sm:$0xff]
    %v81 = vld [vmem:[#allocation7] sm:$0xff]
    %v82 = vld [vmem:[#allocation7 + $0x8] sm:$0xff]
    %v83 = vld [vmem:[#allocation7 + $0x10] sm:$0xff]
    %v84 = vld [vmem:[#allocation7 + $0x18] sm:$0xff]
    %v85 = vld [vmem:[%s4] sm:$0x1]
    %v87 = vlaneseq
    %v88 = vshrl.u32 %v87, 7
    %v89 = vsub.s32 0, %v88
    %v90 = vrot.slane %v85, %v89
    %vm92 = vcmask 261120
    %v94 = vsel %vm92, %v80, 0
    %96 = vmatprep.subr.mxu0 0.0
    %97 = vmatpush1.msra.mxu0 0.0
    %98 = vmatprep.subr.mxu0 0.0
    %99 = vmatpush1.msra.mxu0 0.0
    %100 = vmatprep.subr.mxu0 0.0
    %101 = vmatpush1.msra.mxu0 0.0
    %102 = vmatprep.subr.mxu0 0.0
    %103 = vmatpush1.msra.mxu0 0.0
    %104 = vmatprep.subr.mxu0 0.0
    %105 = vmatpush1.msra.mxu0 0.0
    %106 = vmatprep.subr.mxu0 0.0
    %107 = vmatpush1.msra.mxu0 0.0
    %108 = vmatprep.subr.mxu0 0.0
    %109 = vmatpush1.msra.mxu0 0.0
    %110 = vmatprep.subr.mxu0 0.0
    %111 = vmatpush1.msra.mxu0 0.0
    %112 = vmatprep.subr.mxu0 0.0
    %113 = vmatpush1.msra.mxu0 0.0
    %114 = vmatprep.subr.mxu0 0.0
    %115 = vmatpush1.msra.mxu0 0.0
    %116 = vmatprep.subr.mxu0 0.0
    %117 = vmatpush1.msra.mxu0 0.0
    %118 = vmatprep.subr.mxu0 0.0
    %119 = vmatpush1.msra.mxu0 0.0
    %120 = vmatprep.subr.mxu0 0.0
    %121 = vmatpush1.msra.mxu0 %v84
    %122 = vmatprep.subr.mxu0 0.0
    %123 = vmatpush1.msra.mxu0 %v83
    %124 = vmatprep.subr.mxu0 0.0
    %125 = vmatpush1.msra.mxu0 %v82
    %126 = vmatprep.subr.mxu0 0.0
    %127 = vmatpush1.msra.mxu0 %v81
    %128 = vmatprep.subr.mxu0 0.0
    %129 = vmatpush2.msra.mxu0 0.0
    %130 = vmatprep.subr.mxu0 0.0
    %131 = vmatpush2.msra.mxu0 0.0
    %132 = vmatprep.subr.mxu0 0.0
    %133 = vmatpush2.msra.mxu0 0.0
    %134 = vmatprep.subr.mxu0 0.0
    %135 = vmatpush2.msra.mxu0 0.0
    %136 = vmatprep.subr.mxu0 0.0
    %137 = vmatpush2.msra.mxu0 0.0
    %138 = vmatprep.subr.mxu0 0.0
    %139 = vmatpush2.msra.mxu0 0.0
    %140 = vmatprep.subr.mxu0 0.0
    %141 = vmatpush2.msra.mxu0 0.0
    %142 = vmatprep.subr.mxu0 0.0
    %143 = vmatpush2.msra.mxu0 0.0
    %144 = vmatprep.subr.mxu0 0.0
    %145 = vmatpush2.msra.mxu0 0.0
    %146 = vmatprep.subr.mxu0 0.0
    %147 = vmatpush2.msra.mxu0 0.0
    %148 = vmatprep.subr.mxu0 0.0
    %149 = vmatpush2.msra.mxu0 0.0
    %150 = vmatprep.subr.mxu0 0.0
    %151 = vmatpush2.msra.mxu0 0.0
    %152 = vmatprep.subr.mxu0 0.0
    %153 = vmatpush2.msra.mxu0 0.0
    %154 = vmatprep.subr.mxu0 0.0
    %155 = vmatpush2.msra.mxu0 0.0
    %156 = vmatprep.subr.mxu0 0.0
    %157 = vmatpush2.msra.mxu0 0.0
    %158 = vmatprep.subr.mxu0 0.0
    %159 = vmatpush2.msra.mxu0 0.0
    %160 = vmatprep.mubr.f32.mxu0 0.0
    %161 = vmatmul.mubr.f32.gmra.mxu0 %v94
    %v162 = vpop.f32.mrf.mxu0
    %v163 = vadd.f32 %v90, %v162
    %v164 = vpop.f32.mrf.mxu0
    %165 = vdwg.mxu0
    %v166 = vld [vmem:[#allocation8] sm:$0xff]
    %v167 = vld [vmem:[#allocation8 + $0x8] sm:$0xff]
    %v168 = vld [vmem:[#allocation8 + $0x10] sm:$0xff]
    %v169 = vld [vmem:[#allocation8 + $0x18] sm:$0xff]
    %v170 = vld [vmem:[#allocation8 + $0x20] sm:$0xff]
    %v171 = vld [vmem:[#allocation8 + $0x28] sm:$0xff]
    %v172 = vld [vmem:[#allocation8 + $0x30] sm:$0xff]
    %v173 = vld [vmem:[#allocation8 + $0x38] sm:$0xff]
    %v174 = vld [vmem:[#allocation8 + $0x40] sm:$0xff]
    %v175 = vld [vmem:[#allocation8 + $0x48] sm:$0xff]
    %v176 = vld [vmem:[#allocation8 + $0x50] sm:$0xff]
    %v177 = vld [vmem:[#allocation8 + $0x58] sm:$0xff]
    %v178 = vld [vmem:[#allocation8 + $0x60] sm:$0xff]
    %v179 = vld [vmem:[#allocation8 + $0x68] sm:$0xff]
    %v180 = vld [vmem:[#allocation8 + $0x70] sm:$0xff]
    %v181 = vld [vmem:[#allocation8 + $0x78] sm:$0xff]
    %v182 = vld [vmem:[%s6] sm:$0x1]
    %v184 = vlaneseq
    %v185 = vshrl.u32 %v184, 7
    %v186 = vsub.s32 0, %v185
    %v187 = vrot.slane %v182, %v186
    %189 = vmatprep.subr.mxu0 0.0
    %190 = vmatpush1.msra.mxu0 %v181
    %191 = vmatprep.subr.mxu0 0.0
    %192 = vmatpush1.msra.mxu0 %v180
    %193 = vmatprep.subr.mxu0 0.0
    %194 = vmatpush1.msra.mxu0 %v179
    %195 = vmatprep.subr.mxu0 0.0
    %196 = vmatpush1.msra.mxu0 %v178
    %197 = vmatprep.subr.mxu0 0.0
    %198 = vmatpush1.msra.mxu0 %v177
    %199 = vmatprep.subr.mxu0 0.0
    %200 = vmatpush1.msra.mxu0 %v176
    %201 = vmatprep.subr.mxu0 0.0
    %202 = vmatpush1.msra.mxu0 %v175
    %203 = vmatprep.subr.mxu0 0.0
    %204 = vmatpush1.msra.mxu0 %v174
    %205 = vmatprep.subr.mxu0 0.0
    %206 = vmatpush1.msra.mxu0 %v173
    %207 = vmatprep.subr.mxu0 0.0
    %208 = vmatpush1.msra.mxu0 %v172
    %209 = vmatprep.subr.mxu0 0.0
    %210 = vmatpush1.msra.mxu0 %v171
    %211 = vmatprep.subr.mxu0 0.0
    %212 = vmatpush1.msra.mxu0 %v170
    %213 = vmatprep.subr.mxu0 0.0
    %214 = vmatpush1.msra.mxu0 %v169
    %215 = vmatprep.subr.mxu0 0.0
    %216 = vmatpush1.msra.mxu0 %v168
    %217 = vmatprep.subr.mxu0 0.0
    %218 = vmatpush1.msra.mxu0 %v167
    %219 = vmatprep.subr.mxu0 0.0
    %220 = vmatpush1.msra.mxu0 %v166
    %221 = vmatprep.subr.mxu0 0.0
    %222 = vmatpush2.msra.mxu0 0.0
    %223 = vmatprep.subr.mxu0 0.0
    %224 = vmatpush2.msra.mxu0 0.0
    %225 = vmatprep.subr.mxu0 0.0
    %226 = vmatpush2.msra.mxu0 0.0
    %227 = vmatprep.subr.mxu0 0.0
    %228 = vmatpush2.msra.mxu0 0.0
    %229 = vmatprep.subr.mxu0 0.0
    %230 = vmatpush2.msra.mxu0 0.0
    %231 = vmatprep.subr.mxu0 0.0
    %232 = vmatpush2.msra.mxu0 0.0
    %233 = vmatprep.subr.mxu0 0.0
    %234 = vmatpush2.msra.mxu0 0.0
    %235 = vmatprep.subr.mxu0 0.0
    %236 = vmatpush2.msra.mxu0 0.0
    %237 = vmatprep.subr.mxu0 0.0
    %238 = vmatpush2.msra.mxu0 0.0
    %239 = vmatprep.subr.mxu0 0.0
    %240 = vmatpush2.msra.mxu0 0.0
    %241 = vmatprep.subr.mxu0 0.0
    %242 = vmatpush2.msra.mxu0 0.0
    %243 = vmatprep.subr.mxu0 0.0
    %244 = vmatpush2.msra.mxu0 0.0
    %245 = vmatprep.subr.mxu0 0.0
    %246 = vmatpush2.msra.mxu0 0.0
    %247 = vmatprep.subr.mxu0 0.0
    %248 = vmatpush2.msra.mxu0 0.0
    %249 = vmatprep.subr.mxu0 0.0
    %250 = vmatpush2.msra.mxu0 0.0
    %251 = vmatprep.subr.mxu0 0.0
    %252 = vmatpush2.msra.mxu0 0.0
    %253 = vmatprep.mubr.f32.mxu0 0.0
    %254 = vmatmul.mubr.f32.gmra.mxu0 %v163
    %v255 = vpop.f32.mrf.mxu0
    %v256 = vadd.f32 %v187, %v255
    %v257 = vpop.f32.mrf.mxu0
    %258 = vdwg.mxu0
    %v259 = vxor.u32 %v256, 2147483648
    %v260 = vmul.f32 %v259, 1.442695
    %v261 = vpow.pop %v260
    %v262 = vadd.f32 %v261, 1.0
    %v263 = vrcp.pop %v262
    %v264 = vmul.f32 1.0, %v263
    %v265 = vld [vmem:[#allocation5] sm:$0xff]
    %v266 = vld [vmem:[#allocation5 + $0x8] sm:$0xff]
    %v267 = vld [vmem:[#allocation5 + $0x10] sm:$0xff]
    %v268 = vld [vmem:[#allocation5 + $0x18] sm:$0xff]
    %v269 = vld [vmem:[#allocation5 + $0x20] sm:$0xff]
    %v270 = vld [vmem:[#allocation5 + $0x28] sm:$0xff]
    %v271 = vld [vmem:[#allocation5 + $0x30] sm:$0xff]
    %v272 = vld [vmem:[#allocation5 + $0x38] sm:$0xff]
    %v273 = vld [vmem:[%s2] sm:$0x3]
    %v275 = vlaneseq
    %v276 = vshrl.u32 %v275, 7
    %v277 = vsub.s32 0, %v276
    %v278 = vrot.slane %v273, %v277
    %v279 = vlaneseq
    %v280 = vshrl.u32 %v279, 7
    %v281 = vsub.s32 1, %v280
    %v282 = vrot.slane %v273, %v281
    %285 = vmatprep.subr.mxu0 0.0
    %286 = vmatpush1.msra.mxu0 0.0
    %287 = vmatprep.subr.mxu0 0.0
    %288 = vmatpush1.msra.mxu0 0.0
    %289 = vmatprep.subr.mxu0 0.0
    %290 = vmatpush1.msra.mxu0 0.0
    %291 = vmatprep.subr.mxu0 0.0
    %292 = vmatpush1.msra.mxu0 0.0
    %293 = vmatprep.subr.mxu0 0.0
    %294 = vmatpush1.msra.mxu0 0.0
    %295 = vmatprep.subr.mxu0 0.0
    %296 = vmatpush1.msra.mxu0 0.0
    %297 = vmatprep.subr.mxu0 0.0
    %298 = vmatpush1.msra.mxu0 0.0
    %299 = vmatprep.subr.mxu0 0.0
    %300 = vmatpush1.msra.mxu0 0.0
    %301 = vmatprep.subr.mxu0 0.0
    %302 = vmatpush1.msra.mxu0 0.0
    %303 = vmatprep.subr.mxu0 0.0
    %304 = vmatpush1.msra.mxu0 0.0
    %305 = vmatprep.subr.mxu0 0.0
    %306 = vmatpush1.msra.mxu0 0.0
    %307 = vmatprep.subr.mxu0 0.0
    %308 = vmatpush1.msra.mxu0 0.0
    %309 = vmatprep.subr.mxu0 %v272
    %310 = vmatpush1.msra.mxu0 %v271
    %311 = vmatprep.subr.mxu0 %v270
    %312 = vmatpush1.msra.mxu0 %v269
    %313 = vmatprep.subr.mxu0 %v268
    %314 = vmatpush1.msra.mxu0 %v267
    %315 = vmatprep.subr.mxu0 %v266
    %316 = vmatpush1.msra.mxu0 %v265
    %317 = vmatprep.subr.mxu0 0.0
    %318 = vmatpush2.msra.mxu0 0.0
    %319 = vmatprep.subr.mxu0 0.0
    %320 = vmatpush2.msra.mxu0 0.0
    %321 = vmatprep.subr.mxu0 0.0
    %322 = vmatpush2.msra.mxu0 0.0
    %323 = vmatprep.subr.mxu0 0.0
    %324 = vmatpush2.msra.mxu0 0.0
    %325 = vmatprep.subr.mxu0 0.0
    %326 = vmatpush2.msra.mxu0 0.0
    %327 = vmatprep.subr.mxu0 0.0
    %328 = vmatpush2.msra.mxu0 0.0
    %329 = vmatprep.subr.mxu0 0.0
    %330 = vmatpush2.msra.mxu0 0.0
    %331 = vmatprep.subr.mxu0 0.0
    %332 = vmatpush2.msra.mxu0 0.0
    %333 = vmatprep.subr.mxu0 0.0
    %334 = vmatpush2.msra.mxu0 0.0
    %335 = vmatprep.subr.mxu0 0.0
    %336 = vmatpush2.msra.mxu0 0.0
    %337 = vmatprep.subr.mxu0 0.0
    %338 = vmatpush2.msra.mxu0 0.0
    %339 = vmatprep.subr.mxu0 0.0
    %340 = vmatpush2.msra.mxu0 0.0
    %341 = vmatprep.subr.mxu0 0.0
    %342 = vmatpush2.msra.mxu0 0.0
    %343 = vmatprep.subr.mxu0 0.0
    %344 = vmatpush2.msra.mxu0 0.0
    %345 = vmatprep.subr.mxu0 0.0
    %346 = vmatpush2.msra.mxu0 0.0
    %347 = vmatprep.subr.mxu0 0.0
    %348 = vmatpush2.msra.mxu0 0.0
    %349 = vmatprep.mubr.f32.mxu0 0.0
    %350 = vmatmul.mubr.f32.gmra.mxu0 %v94
    %v351 = vpop.f32.mrf.mxu0
    %v352 = vadd.f32 %v278, %v351
    %v353 = vpop.f32.mrf.mxu0
    %v354 = vadd.f32 %v282, %v353
    %355 = vdwg.mxu0
    %v356 = vsub.f32 %v352, %v354
    %v357 = vmul.f32 %v264, %v356
    %v358 = vadd.f32 %v354, %v357
    %vm359 = vcmask 130048
    %360 = vst.msk [vmem:[#allocation10] sm:$0xff] %vm359, %v358
    // Predicated region
    $region46: #{tpu_custom_call.1} parent=1 // pred_check
      _
    $region47: #{tpu_custom_call.1} parent=1 // pred_check_branch
      %362 = sbr.rel (0) target = $region49
    $region48: #{tpu_custom_call.1} parent=1 // pred_region
      %s364 = ssub.s32 128, 128
      %365 = vsyncadd [#allocation4], %s364
      %s367 = sshll.u32 [#allocation10], 4
      %s368 = int_to_ptr.vmem [resolvable:$true] %s367
      %370 = dma.vmem_to_hbm [thread:$0]  %s368, 128, %s7, [#allocation4]
    $region49: #{tpu_custom_call.1} parent=1 // pred_fallthru
      _
    // Predicated region
    $region50: #{tpu_custom_call.1} parent=1 // pred_check
      _
    $region51: #{tpu_custom_call.1} parent=1 // pred_check_branch
      %372 = sbr.rel (0) target = $region53
    $region52: #{tpu_custom_call.1} parent=1 // pred_region
      %373 = dma.done [#allocation4], 128
    $region53: #{tpu_custom_call.1} parent=1 // pred_fallthru
      _
    %374 = vsyncpa [#allocation3], 1
    %375 = vsyncpa [#allocation6], 1
    %376 = vsyncpa [#allocation9], 1
    %377 = vsyncpa [#allocation4], 1

</llo_original>
